<compile_context>
chip_gen: v7x
topology: tpu7x:2x2x1
jax: 0.10.0
libtpu: 0.0.40
codegen_flags: <defaults>
</compile_context>

<pallas_src>
import jax
import jax.numpy as jnp
from jax.experimental import pallas as pl
from jax.experimental.pallas import tpu as pltpu

N_ACT = 41     # number of actions (policy logits)
HID = 64       # per-head hidden width
HID2 = 2 * HID # fused hidden width (= 128, one full lane row)
OUT_W = 128    # lane-dense packed output width


def _policy_kernel(x_ref, w1_ref, b1_ref, w2_ref, b2_ref, out_ref):
    x = x_ref[...]                                                   # (TB, 3) f32

    # ---- fused layer 1: both heads' hidden in one (TB, 128) tile ----
    h = jnp.dot(x, w1_ref[...], preferred_element_type=jnp.float32) + b1_ref[...]
    h = jnp.maximum(h, 0.0)                                          # relu

    # ---- fused layer 2: block-diagonal weight -> logits (0:41) + value (41) ----
    z = jnp.dot(h, w2_ref[...], preferred_element_type=jnp.float32) + b2_ref[...]  # (TB, 128)

    lane = jax.lax.broadcasted_iota(jnp.int32, z.shape, 1)
    is_logit = lane < N_ACT
    is_value = lane == N_ACT

    # numerically-stable softmax over the logit lanes only
    logits = jnp.where(is_logit, z, -jnp.inf)
    m = jnp.max(logits, axis=1, keepdims=True)
    e = jnp.exp(logits - m)                          # exp(-inf) = 0 on masked lanes
    denom = jnp.sum(e, axis=1, keepdims=True)
    probs = e * pl.reciprocal(denom, approx=False)   # exact; approx would break 1e-5 tol

    # packed lane-dense output: probs in lanes 0:41, value in lane 41, zeros elsewhere
    out_ref[...] = jnp.where(is_value, z, probs)


def prepare_fused_params(p):
    """Fuse the four nn.Linear layers into two lane-dense matmuls (done once, outside the kernel)."""
    w1_cat = jnp.concatenate([p["w1p"], p["w1v"]], axis=1)           # (3, 128)
    b1_cat = jnp.concatenate([p["b1p"], p["b1v"]], axis=1)           # (1, 128)

    w2_cat = jnp.zeros((HID2, OUT_W), jnp.float32)
    w2_cat = w2_cat.at[:HID, :N_ACT].set(p["w2p"])                   # policy block
    w2_cat = w2_cat.at[HID:, N_ACT:N_ACT + 1].set(p["w3v"])          # value block
    b2_cat = jnp.zeros((1, OUT_W), jnp.float32)
    b2_cat = b2_cat.at[:, :N_ACT].set(p["b2p"])
    b2_cat = b2_cat.at[:, N_ACT:N_ACT + 1].set(p["b3v"])
    return dict(w1_cat=w1_cat, b1_cat=b1_cat, w2_cat=w2_cat, b2_cat=b2_cat)


def policy_forward(x, fused):
    """x: (B, 3) f32. fused: dict from prepare_fused_params. Returns (probs (B,41), value (B,1))."""
    B = x.shape[0]
    # Row tile: 512 for large batches (≈85% of HBM roofline, amortizes per-step
    # overhead); for small batches just round the whole batch up to a sublane multiple.
    if B >= 512:
        tb = 512
    else:
        tb = max(8, ((B + 7) // 8) * 8)
    b_pad = ((B + tb - 1) // tb) * tb
    if b_pad != B:
        x = jnp.pad(x, ((0, b_pad - B), (0, 0)))
    grid = (b_pad // tb,)

    out = pl.pallas_call(
        _policy_kernel,
        out_shape=jax.ShapeDtypeStruct((b_pad, OUT_W), jnp.float32),
        grid=grid,
        in_specs=[
            pl.BlockSpec((tb, 3), lambda i: (i, 0)),            # x: tiled over batch
            pl.BlockSpec((3, HID2), lambda i: (0, 0)),          # W1_cat: replicated
            pl.BlockSpec((1, HID2), lambda i: (0, 0)),          # b1_cat
            pl.BlockSpec((HID2, OUT_W), lambda i: (0, 0)),      # W2_cat (block-diag)
            pl.BlockSpec((1, OUT_W), lambda i: (0, 0)),         # b2_cat
        ],
        out_specs=pl.BlockSpec((tb, OUT_W), lambda i: (i, 0)),  # lane-dense packed slab
        compiler_params=pltpu.CompilerParams(
            dimension_semantics=("parallel",)),                 # lets v7x use both TCs
    )(x, fused["w1_cat"], fused["b1_cat"], fused["w2_cat"], fused["b2_cat"])

    probs = out[:B, :N_ACT]
    value = out[:B, N_ACT:N_ACT + 1]
    return probs, value


def init_params(key):
    """Deterministic init mimicking nn.Linear's U(-1/sqrt(fan_in), 1/sqrt(fan_in))."""
    def linear(k, fan_in, fan_out):
        kw, kb = jax.random.split(k)
        bound = 1.0 / jnp.sqrt(jnp.float32(fan_in))
        # stored (in, out) so the matmul is x @ W (== PyTorch's x @ W^T with W (out,in))
        w = jax.random.uniform(kw, (fan_in, fan_out), jnp.float32, -bound, bound)
        b = jax.random.uniform(kb, (1, fan_out), jnp.float32, -bound, bound)
        return w, b

    k1, k2, k3, k4 = jax.random.split(key, 4)
    w1p, b1p = linear(k1, 3, HID)
    w2p, b2p = linear(k2, HID, N_ACT)
    w1v, b1v = linear(k3, 3, HID)
    w3v, b3v = linear(k4, HID, 1)
    return dict(w1p=w1p, b1p=b1p, w2p=w2p, b2p=b2p,
                w1v=w1v, b1v=b1v, w3v=w3v, b3v=b3v)


def reference_forward(x, p):
    h_p = jnp.maximum(x @ p["w1p"] + p["b1p"], 0.0)
    logits = h_p @ p["w2p"] + p["b2p"]
    probs = jax.nn.softmax(logits, axis=1)
    h_v = jnp.maximum(x @ p["w1v"] + p["b1v"], 0.0)
    value = h_v @ p["w3v"] + p["b3v"]
    return probs, value


if __name__ == "__main__":
    key = jax.random.PRNGKey(0)
    k_params, k_x = jax.random.split(key)

    params = init_params(k_params)
    fused = prepare_fused_params(params)

    B = 8
    x = jax.random.normal(k_x, (B, 3), dtype=jnp.float32)

    probs, value = policy_forward(x, fused)
    probs = jax.block_until_ready(probs)
    value = jax.block_until_ready(value)

    # sanity check against the pure-JAX (unfused) reference
    probs_ref, value_ref = reference_forward(x, params)
    assert probs.shape == (B, N_ACT) and value.shape == (B, 1)
    assert jnp.allclose(probs, probs_ref, atol=1e-5, rtol=1e-5)
    assert jnp.allclose(value, value_ref, atol=1e-5, rtol=1e-5)
    assert jnp.allclose(jnp.sum(probs, axis=1), 1.0, atol=1e-5)

    print("KERNEL_OK")
</pallas_src>

<mosaic_0001>
module attributes {stable_mosaic.version = 11 : i64} {
  func.func @_policy_kernel(%arg0: i32, %arg1: memref<8x3xf32, #tpu.memory_space<vmem>>, %arg2: memref<3x128xf32, #tpu.memory_space<vmem>>, %arg3: memref<1x128xf32, #tpu.memory_space<vmem>>, %arg4: memref<128x128xf32, #tpu.memory_space<vmem>>, %arg5: memref<1x128xf32, #tpu.memory_space<vmem>>, %arg6: memref<8x128xf32, #tpu.memory_space<vmem>>) attributes {dimension_semantics = [#tpu.dimension_semantics<parallel>], iteration_bounds = array<i64: 1>, scalar_prefetch = 0 : i64, scratch_operands = 0 : i64, tpu.core_type = #tpu.core_type<tc>, window_params = [{transform_indices = @transform_0, window_bounds = array<i64: 8, 3>}, {pipeline_mode = #tpu.pipeline_mode<synchronous>, transform_indices = @transform_1, window_bounds = array<i64: 3, 128>}, {pipeline_mode = #tpu.pipeline_mode<synchronous>, transform_indices = @transform_2, window_bounds = array<i64: 1, 128>}, {pipeline_mode = #tpu.pipeline_mode<synchronous>, transform_indices = @transform_3, window_bounds = array<i64: 128, 128>}, {pipeline_mode = #tpu.pipeline_mode<synchronous>, transform_indices = @transform_4, window_bounds = array<i64: 1, 128>}, {transform_indices = @transform_5, window_bounds = array<i64: 8, 128>}]} {
    %c0 = arith.constant 0 : index
    %c0_0 = arith.constant 0 : index
    %0 = vector.load %arg1[%c0, %c0_0] : memref<8x3xf32, #tpu.memory_space<vmem>>, vector<8x3xf32>
    %c0_1 = arith.constant 0 : index
    %c0_2 = arith.constant 0 : index
    %1 = vector.load %arg2[%c0_1, %c0_2] : memref<3x128xf32, #tpu.memory_space<vmem>>, vector<3x128xf32>
    %cst = arith.constant dense<0.000000e+00> : vector<8x128xf32>
    %2 = tpu.matmul %0, %1, %cst {dimension_numbers = #tpu.dot_dimension_numbers<[1], [0], [0], [1], [0, 0, 1, 1], [], []>} : vector<8x3xf32>, vector<3x128xf32>, vector<8x128xf32> -> vector<8x128xf32>
    %c0_3 = arith.constant 0 : index
    %c0_4 = arith.constant 0 : index
    %3 = vector.load %arg3[%c0_3, %c0_4] : memref<1x128xf32, #tpu.memory_space<vmem>>, vector<1x128xf32>
    %4 = vector.broadcast %3 : vector<1x128xf32> to vector<8x128xf32>
    %5 = arith.addf %2, %4 : vector<8x128xf32>
    %cst_5 = arith.constant 0.000000e+00 : f32
    %6 = vector.broadcast %cst_5 : f32 to vector<8x128xf32>
    %7 = arith.maximumf %5, %6 : vector<8x128xf32>
    %c0_6 = arith.constant 0 : index
    %c0_7 = arith.constant 0 : index
    %8 = vector.load %arg4[%c0_6, %c0_7] : memref<128x128xf32, #tpu.memory_space<vmem>>, vector<128x128xf32>
    %cst_8 = arith.constant dense<0.000000e+00> : vector<8x128xf32>
    %9 = tpu.matmul %7, %8, %cst_8 {dimension_numbers = #tpu.dot_dimension_numbers<[1], [0], [0], [1], [0, 0, 1, 1], [], []>} : vector<8x128xf32>, vector<128x128xf32>, vector<8x128xf32> -> vector<8x128xf32>
    %c0_9 = arith.constant 0 : index
    %c0_10 = arith.constant 0 : index
    %10 = vector.load %arg5[%c0_9, %c0_10] : memref<1x128xf32, #tpu.memory_space<vmem>>, vector<1x128xf32>
    %11 = vector.broadcast %10 : vector<1x128xf32> to vector<8x128xf32>
    %12 = arith.addf %9, %11 : vector<8x128xf32>
    %13 = tpu.iota {dimensions = array<i32: 1>} : vector<8x128xi32>
    %c41_i32 = arith.constant 41 : i32
    %14 = vector.broadcast %c41_i32 : i32 to vector<8x128xi32>
    %15 = arith.cmpi slt, %13, %14 : vector<8x128xi32>
    %c41_i32_11 = arith.constant 41 : i32
    %16 = vector.broadcast %c41_i32_11 : i32 to vector<8x128xi32>
    %17 = arith.cmpi eq, %13, %16 : vector<8x128xi32>
    %cst_12 = arith.constant 0xFF800000 : f32
    %18 = vector.broadcast %cst_12 : f32 to vector<8x128xf32>
    %19 = arith.select %15, %12, %18 : vector<8x128xi1>, vector<8x128xf32>
    %cst_13 = arith.constant dense<0xFF800000> : vector<8xf32>
    %20 = vector.multi_reduction <maximumf>, %19, %cst_13 [1] : vector<8x128xf32> to vector<8xf32>
    %21 = vector.shape_cast %20 : vector<8xf32> to vector<8x1xf32>
    %22 = vector.broadcast %21 : vector<8x1xf32> to vector<8x128xf32>
    %23 = arith.subf %19, %22 : vector<8x128xf32>
    %24 = math.exp %23 : vector<8x128xf32>
    %cst_14 = arith.constant dense<0.000000e+00> : vector<8xf32>
    %25 = vector.multi_reduction <add>, %24, %cst_14 [1] : vector<8x128xf32> to vector<8xf32>
    %26 = vector.shape_cast %25 : vector<8xf32> to vector<8x1xf32>
    %27 = tpu.reciprocal %26 : vector<8x1xf32> -> vector<8x1xf32>
    %28 = vector.broadcast %27 : vector<8x1xf32> to vector<8x128xf32>
    %29 = arith.mulf %24, %28 : vector<8x128xf32>
    %30 = arith.select %17, %12, %29 : vector<8x128xi1>, vector<8x128xf32>
    %c0_15 = arith.constant 0 : index
    %c0_16 = arith.constant 0 : index
    %31 = vector.load %arg6[%c0_15, %c0_16] : memref<8x128xf32, #tpu.memory_space<vmem>>, vector<8x128xf32>
    tpu.vector_store %arg6[%c0_15, %c0_16], %30 {strides = array<i32>} : memref<8x128xf32, #tpu.memory_space<vmem>>, vector<8x128xf32>,
    return
  }
  func.func @transform_0(%arg0: i32) -> (i32, i32) {
    %c0_i32 = arith.constant 0 : i32
    %c0_i32_0 = arith.constant 0 : i32
    return %arg0, %c0_i32 : i32, i32
  }
  func.func @transform_1(%arg0: i32) -> (i32, i32) {
    %c0_i32 = arith.constant 0 : i32
    %c0_i32_0 = arith.constant 0 : i32
    %c0_i32_1 = arith.constant 0 : i32
    return %c0_i32, %c0_i32_0 : i32, i32
  }
  func.func @transform_2(%arg0: i32) -> (i32, i32) {
    %c0_i32 = arith.constant 0 : i32
    %c0_i32_0 = arith.constant 0 : i32
    %c0_i32_1 = arith.constant 0 : i32
    return %c0_i32, %c0_i32_0 : i32, i32
  }
  func.func @transform_3(%arg0: i32) -> (i32, i32) {
    %c0_i32 = arith.constant 0 : i32
    %c0_i32_0 = arith.constant 0 : i32
    %c0_i32_1 = arith.constant 0 : i32
    return %c0_i32, %c0_i32_0 : i32, i32
  }
  func.func @transform_4(%arg0: i32) -> (i32, i32) {
    %c0_i32 = arith.constant 0 : i32
    %c0_i32_0 = arith.constant 0 : i32
    %c0_i32_1 = arith.constant 0 : i32
    return %c0_i32, %c0_i32_0 : i32, i32
  }
  func.func @transform_5(%arg0: i32) -> (i32, i32) {
    %c0_i32 = arith.constant 0 : i32
    %c0_i32_0 = arith.constant 0 : i32
    return %arg0, %c0_i32 : i32, i32
  }
}

</mosaic_0001>

<llo_original>
// kernel: tpu_custom_call.1
$region0: #{tpu_custom_call.1}
  #allocation0 [shape = 'u32[]', space=smem, size = 0x4, offset = 0x4, fixed_abs, tag = 'smem constant byte address 0x4 - core index']
  #allocation1 [shape = 'u32[144,128]{1,0:T(1,128)}', space=vmem, size = 0x12000, scoped, tag = 'internal scratch']
  %s0 = inlined_call_operand.vmem [shape: f32[8,3], index: 0, kind: input, shape index: {}]
  %s1 = inlined_call_operand.vmem [shape: f32[3,128], index: 1, kind: input, shape index: {}]
  %s2 = inlined_call_operand.vmem [shape: f32[1,128], index: 2, kind: input, shape index: {}]
  %s3 = inlined_call_operand.hbm [shape: f32[128,128], index: 3, kind: input, shape index: {}]
  %s4 = inlined_call_operand.vmem [shape: f32[1,128], index: 4, kind: input, shape index: {}]
  %s5 = inlined_call_operand.hbm [shape: f32[8,128], index: 5, kind: output, shape index: {}]
  %s6 = sld [smem:[#allocation0]]
  $region34: #{tpu_custom_call.1} parent=0
    _
  %s8 = ssub.s32 1, %s6
  %s9 = scalar_select 0, %s8, %s6
  $region1: #{tpu_custom_call.1} parent=0
    #allocation2 [shape = 'u8[65536]{0}', space=vmem, size = 0x10000, scoped, tag = 'input window, operand 3, single buffered']
    #allocation3 [shape = 's32[1]{0}', space=sflag, size = 0x4, scoped, tag = 'scoped memory for tpu_custom_call.1']
    #allocation4 [shape = 's32[1]{0}', space=sflag, size = 0x4, scoped, tag = 'scoped memory for tpu_custom_call.1']
    #allocation5 [shape = 'u8[4096]{0}', space=vmem, size = 0x1000, scoped, tag = 'output window, operand 0, single buffered']
    %10 = vsyncpa [#allocation3], 0
    %11 = vsyncpa [#allocation4], 0
    // Predicated region
    $region2: #{tpu_custom_call.1} parent=1 // pred_check
      _
    $region3: #{tpu_custom_call.1} parent=1 // pred_check_branch
      %13 = sbr.rel (0) target = $region5
    $region4: #{tpu_custom_call.1} parent=1 // pred_region
      _
    $region5: #{tpu_custom_call.1} parent=1 // pred_fallthru
      _
    // Predicated region
    $region6: #{tpu_custom_call.1} parent=1 // pred_check
      _
    $region7: #{tpu_custom_call.1} parent=1 // pred_check_branch
      %15 = sbr.rel (0) target = $region9
    $region8: #{tpu_custom_call.1} parent=1 // pred_region
      _
    $region9: #{tpu_custom_call.1} parent=1 // pred_fallthru
      _
    // Predicated region
    $region10: #{tpu_custom_call.1} parent=1 // pred_check
      _
    $region11: #{tpu_custom_call.1} parent=1 // pred_check_branch
      %17 = sbr.rel (0) target = $region13
    $region12: #{tpu_custom_call.1} parent=1 // pred_region
      _
    $region13: #{tpu_custom_call.1} parent=1 // pred_fallthru
      _
    // Predicated region
    $region14: #{tpu_custom_call.1} parent=1 // pred_check
      _
    $region15: #{tpu_custom_call.1} parent=1 // pred_check_branch
      %19 = sbr.rel (0) target = $region17
    $region16: #{tpu_custom_call.1} parent=1 // pred_region
      %s21 = ssub.s32 2048, 2048
      %22 = vsyncadd [#allocation3], %s21
      %s23 = sshll.u32 [#allocation2], 4
      %s24 = int_to_ptr.vmem [resolvable:$true] %s23
      %29 = dma.hbm_to_vmem [thread:$0]  %s3, 2048, %s24, [#allocation3], 128, 128, 8
    $region17: #{tpu_custom_call.1} parent=1 // pred_fallthru
      _
    // Predicated region
    $region18: #{tpu_custom_call.1} parent=1 // pred_check
      _
    $region19: #{tpu_custom_call.1} parent=1 // pred_check_branch
      %31 = sbr.rel (0) target = $region21
    $region20: #{tpu_custom_call.1} parent=1 // pred_region
      _
    $region21: #{tpu_custom_call.1} parent=1 // pred_fallthru
      _
    // Predicated region
    $region22: #{tpu_custom_call.1} parent=1 // pred_check
      _
    $region23: #{tpu_custom_call.1} parent=1 // pred_check_branch
      %33 = sbr.rel (0) target = $region25
    $region24: #{tpu_custom_call.1} parent=1 // pred_region
      %34 = dma.done [#allocation3], 2048
    $region25: #{tpu_custom_call.1} parent=1 // pred_fallthru
      _
    %v35 = vld [vmem:[%s0] sm:$0xff]
    %v36 = vld [vmem:[%s1] sm:$0x7]
    %v37 = vld [vmem:[%s2] sm:$0x1]
    %v39 = vlaneseq
    %v40 = vshrl.u32 %v39, 7
    %v41 = vsub.s32 0, %v40
    %v42 = vrot.slane %v37, %v41
    %vm44 = vcmask 23552
    %v46 = vsel %vm44, %v35, 0
    %vm48 = vcmask 1042432
    %v50 = vsel %vm48, %v36, 0
    %52 = vmatprep.subr.mxu0 0.0
    %53 = vmatpush1.msra.mxu0 %v50
    %54 = vmatprep.subr.mxu0 0.0
    %55 = vmatpush1.msra.mxu0 0.0
    %56 = vmatprep.subr.mxu0 0.0
    %57 = vmatpush1.msra.mxu0 0.0
    %58 = vmatprep.subr.mxu0 0.0
    %59 = vmatpush1.msra.mxu0 0.0
    %60 = vmatprep.subr.mxu0 0.0
    %61 = vmatpush1.msra.mxu0 0.0
    %62 = vmatprep.subr.mxu0 0.0
    %63 = vmatpush1.msra.mxu0 0.0
    %64 = vmatprep.subr.mxu0 0.0
    %65 = vmatpush1.msra.mxu0 0.0
    %66 = vmatprep.subr.mxu0 0.0
    %67 = vmatpush1.msra.mxu0 0.0
    %68 = vmatprep.subr.mxu0 0.0
    %69 = vmatpush1.msra.mxu0 0.0
    %70 = vmatprep.subr.mxu0 0.0
    %71 = vmatpush1.msra.mxu0 0.0
    %72 = vmatprep.subr.mxu0 0.0
    %73 = vmatpush1.msra.mxu0 0.0
    %74 = vmatprep.subr.mxu0 0.0
    %75 = vmatpush1.msra.mxu0 0.0
    %76 = vmatprep.subr.mxu0 0.0
    %77 = vmatpush1.msra.mxu0 0.0
    %78 = vmatprep.subr.mxu0 0.0
    %79 = vmatpush1.msra.mxu0 0.0
    %80 = vmatprep.subr.mxu0 0.0
    %81 = vmatpush1.msra.mxu0 0.0
    %82 = vmatprep.subr.mxu0 0.0
    %83 = vmatpush1.msra.mxu0 0.0
    %84 = vmatprep.subr.mxu0 0.0
    %85 = vmatpush1.msra.mxu0 0.0
    %86 = vmatprep.subr.mxu0 0.0
    %87 = vmatpush1.msra.mxu0 0.0
    %88 = vmatprep.subr.mxu0 0.0
    %89 = vmatpush1.msra.mxu0 0.0
    %90 = vmatprep.subr.mxu0 0.0
    %91 = vmatpush1.msra.mxu0 0.0
    %92 = vmatprep.subr.mxu0 0.0
    %93 = vmatpush1.msra.mxu0 0.0
    %94 = vmatprep.subr.mxu0 0.0
    %95 = vmatpush1.msra.mxu0 0.0
    %96 = vmatprep.subr.mxu0 0.0
    %97 = vmatpush1.msra.mxu0 0.0
    %98 = vmatprep.subr.mxu0 0.0
    %99 = vmatpush1.msra.mxu0 0.0
    %100 = vmatprep.subr.mxu0 0.0
    %101 = vmatpush1.msra.mxu0 0.0
    %102 = vmatprep.subr.mxu0 0.0
    %103 = vmatpush1.msra.mxu0 0.0
    %104 = vmatprep.subr.mxu0 0.0
    %105 = vmatpush1.msra.mxu0 0.0
    %106 = vmatprep.subr.mxu0 0.0
    %107 = vmatpush1.msra.mxu0 0.0
    %108 = vmatprep.subr.mxu0 0.0
    %109 = vmatpush1.msra.mxu0 0.0
    %110 = vmatprep.subr.mxu0 0.0
    %111 = vmatpush1.msra.mxu0 0.0
    %112 = vmatprep.subr.mxu0 0.0
    %113 = vmatpush1.msra.mxu0 0.0
    %114 = vmatprep.subr.mxu0 0.0
    %115 = vmatpush1.msra.mxu0 0.0
    %116 = vmatprep.mubr.f32.mxu0 0.0
    %117 = vmatmul.mubr.f32.gmra.mrb[0].mxu0 %v46
    %v118 = vpop.f32.mrb[0].mxu0
    %v119 = vadd.f32 %v42, %v118
    %v120 = vpop.f32.mrb[0].mxu0
    %121 = vdwg.mxu0
    %v122 = vmax.f32 %v119, 0.0
    %v123 = vld [vmem:[#allocation2] sm:$0xff]
    %v124 = vld [vmem:[#allocation2 + $0x8] sm:$0xff]
    %v125 = vld [vmem:[#allocation2 + $0x10] sm:$0xff]
    %v126 = vld [vmem:[#allocation2 + $0x18] sm:$0xff]
    %v127 = vld [vmem:[#allocation2 + $0x20] sm:$0xff]
    %v128 = vld [vmem:[#allocation2 + $0x28] sm:$0xff]
    %v129 = vld [vmem:[#allocation2 + $0x30] sm:$0xff]
    %v130 = vld [vmem:[#allocation2 + $0x38] sm:$0xff]
    %v131 = vld [vmem:[#allocation2 + $0x40] sm:$0xff]
    %v132 = vld [vmem:[#allocation2 + $0x48] sm:$0xff]
    %v133 = vld [vmem:[#allocation2 + $0x50] sm:$0xff]
    %v134 = vld [vmem:[#allocation2 + $0x58] sm:$0xff]
    %v135 = vld [vmem:[#allocation2 + $0x60] sm:$0xff]
    %v136 = vld [vmem:[#allocation2 + $0x68] sm:$0xff]
    %v137 = vld [vmem:[#allocation2 + $0x70] sm:$0xff]
    %v138 = vld [vmem:[#allocation2 + $0x78] sm:$0xff]
    %v139 = vld [vmem:[%s4] sm:$0x1]
    %v141 = vlaneseq
    %v142 = vshrl.u32 %v141, 7
    %v143 = vsub.s32 0, %v142
    %v144 = vrot.slane %v139, %v143
    %146 = vmatprep.subr.mxu0 0.0
    %147 = vmatpush1.msra.mxu0 %v123
    %148 = vmatprep.subr.mxu0 0.0
    %149 = vmatpush1.msra.mxu0 %v124
    %150 = vmatprep.subr.mxu0 0.0
    %151 = vmatpush1.msra.mxu0 %v125
    %152 = vmatprep.subr.mxu0 0.0
    %153 = vmatpush1.msra.mxu0 %v126
    %154 = vmatprep.subr.mxu0 0.0
    %155 = vmatpush1.msra.mxu0 %v127
    %156 = vmatprep.subr.mxu0 0.0
    %157 = vmatpush1.msra.mxu0 %v128
    %158 = vmatprep.subr.mxu0 0.0
    %159 = vmatpush1.msra.mxu0 %v129
    %160 = vmatprep.subr.mxu0 0.0
    %161 = vmatpush1.msra.mxu0 %v130
    %162 = vmatprep.subr.mxu0 0.0
    %163 = vmatpush1.msra.mxu0 %v131
    %164 = vmatprep.subr.mxu0 0.0
    %165 = vmatpush1.msra.mxu0 %v132
    %166 = vmatprep.subr.mxu0 0.0
    %167 = vmatpush1.msra.mxu0 %v133
    %168 = vmatprep.subr.mxu0 0.0
    %169 = vmatpush1.msra.mxu0 %v134
    %170 = vmatprep.subr.mxu0 0.0
    %171 = vmatpush1.msra.mxu0 %v135
    %172 = vmatprep.subr.mxu0 0.0
    %173 = vmatpush1.msra.mxu0 %v136
    %174 = vmatprep.subr.mxu0 0.0
    %175 = vmatpush1.msra.mxu0 %v137
    %176 = vmatprep.subr.mxu0 0.0
    %177 = vmatpush1.msra.mxu0 %v138
    %178 = vmatprep.subr.mxu0 0.0
    %179 = vmatpush1.msra.mxu0 0.0
    %180 = vmatprep.subr.mxu0 0.0
    %181 = vmatpush1.msra.mxu0 0.0
    %182 = vmatprep.subr.mxu0 0.0
    %183 = vmatpush1.msra.mxu0 0.0
    %184 = vmatprep.subr.mxu0 0.0
    %185 = vmatpush1.msra.mxu0 0.0
    %186 = vmatprep.subr.mxu0 0.0
    %187 = vmatpush1.msra.mxu0 0.0
    %188 = vmatprep.subr.mxu0 0.0
    %189 = vmatpush1.msra.mxu0 0.0
    %190 = vmatprep.subr.mxu0 0.0
    %191 = vmatpush1.msra.mxu0 0.0
    %192 = vmatprep.subr.mxu0 0.0
    %193 = vmatpush1.msra.mxu0 0.0
    %194 = vmatprep.subr.mxu0 0.0
    %195 = vmatpush1.msra.mxu0 0.0
    %196 = vmatprep.subr.mxu0 0.0
    %197 = vmatpush1.msra.mxu0 0.0
    %198 = vmatprep.subr.mxu0 0.0
    %199 = vmatpush1.msra.mxu0 0.0
    %200 = vmatprep.subr.mxu0 0.0
    %201 = vmatpush1.msra.mxu0 0.0
    %202 = vmatprep.subr.mxu0 0.0
    %203 = vmatpush1.msra.mxu0 0.0
    %204 = vmatprep.subr.mxu0 0.0
    %205 = vmatpush1.msra.mxu0 0.0
    %206 = vmatprep.subr.mxu0 0.0
    %207 = vmatpush1.msra.mxu0 0.0
    %208 = vmatprep.subr.mxu0 0.0
    %209 = vmatpush1.msra.mxu0 0.0
    %210 = vmatprep.mubr.f32.mxu0 0.0
    %211 = vmatmul.mubr.f32.gmra.mrb[0].mxu0 %v122
    %v212 = vpop.f32.mrb[0].mxu0
    %v213 = vadd.f32 %v144, %v212
    %v214 = vpop.f32.mrb[0].mxu0
    %215 = vdwg.mxu0
    %v216 = vlaneseq
    %v217 = vand.u32 %v216, 127
    %vm218 = vcmp.lt.s32.totalorder %v217, 41
    %vm219 = vcmp.eq.s32.totalorder %v217, 41
    %v220 = vsel %vm218, %v213, -inf
    %221 = vmax.xlane.f32.xlu0 %v220
    %v222 = vpop.xlane.xlu0 %221
    %v223 = vsub.f32 %v220, %v222
    %v224 = vmul.f32 %v223, 1.442695
    %v225 = vpow.pop %v224
    %226 = vadd.xlane.f32.xlu0 %v225
    %v227 = vpop.xlane.xlu0 %226
    %v228 = vrcp.pop %v227
    %v229 = vmul.f32 %v225, %v228
    %v230 = vsel %vm219, %v213, %v229
    %231 = vst [vmem:[#allocation5] sm:$0xff] %v230
    // Predicated region
    $region26: #{tpu_custom_call.1} parent=1 // pred_check
      _
    $region27: #{tpu_custom_call.1} parent=1 // pred_check_branch
      %233 = sbr.rel (0) target = $region29
    $region28: #{tpu_custom_call.1} parent=1 // pred_region
      %s235 = ssub.s32 128, 128
      %236 = vsyncadd [#allocation4], %s235
      %s238 = sshll.u32 [#allocation5], 4
      %s239 = int_to_ptr.vmem [resolvable:$true] %s238
      %241 = dma.vmem_to_hbm [thread:$0]  %s239, 128, %s5, [#allocation4]
    $region29: #{tpu_custom_call.1} parent=1 // pred_fallthru
      _
    // Predicated region
    $region30: #{tpu_custom_call.1} parent=1 // pred_check
      _
    $region31: #{tpu_custom_call.1} parent=1 // pred_check_branch
      %243 = sbr.rel (0) target = $region33
    $region32: #{tpu_custom_call.1} parent=1 // pred_region
      %244 = dma.done [#allocation4], 128
    $region33: #{tpu_custom_call.1} parent=1 // pred_fallthru
      _
    %245 = vsyncpa [#allocation3], 1
    %246 = vsyncpa [#allocation4], 1

</llo_original>
